<compile_context>
chip_gen: v6e
topology: v6e:2x2x1
jax: 0.10.0
libtpu: 0.0.40
codegen_flags: <defaults>
</compile_context>

<pallas_src>
import functools

import jax
import jax.numpy as jnp
from jax.experimental import pallas as pl
from jax.experimental.pallas import tpu as pltpu

_LN_EPS = 1e-6  # matches nn.LayerNorm(in_channels, eps=1e-06) in the spec


def _round_up(a, m):
    return (a + m - 1) // m * m


def _classifier_kernel(x_ref, gamma_ref, beta_ref, w_ref, b_ref, o_ref, y_ref):
    # Grid: (batch_tile i [parallel], out_tile j [arbitrary, inner]).
    # x_ref:     (TB, C)   input rows (block index constant over j -> no re-DMA)
    # gamma_ref: (1, C)    LayerNorm scale
    # beta_ref:  (1, C)    LayerNorm shift
    # w_ref:     (C, TN)   Linear weight tile (pre-transposed, lane-padded)
    # b_ref:     (1, TN)   Linear bias tile (lane-padded)
    # o_ref:     (TB, TN)  output tile
    # y_ref:     (TB, C)   VMEM scratch: normalized activations (native dtype)

    @pl.when(pl.program_id(1) == 0)
    def _():
        # LayerNorm statistics in f32 (v5e VPU/EUP have no bf16 path).
        x = x_ref[...].astype(jnp.float32)
        mean = jnp.mean(x, axis=-1, keepdims=True)
        centered = x - mean
        var = jnp.mean(centered * centered, axis=-1, keepdims=True)
        xn = centered * jax.lax.rsqrt(var + _LN_EPS)
        y = xn * gamma_ref[...].astype(jnp.float32) + beta_ref[...].astype(jnp.float32)
        # Store in the input's native dtype so the MXU sees bf16 when params
        # are bf16 (f32 inputs stay f32 -> bit-exact LN output).
        y_ref[...] = y.astype(y_ref.dtype)

    # MXU matmul: native-dtype operands, f32 accumulation.
    out = jnp.dot(y_ref[...], w_ref[...], preferred_element_type=jnp.float32)
    out = out + b_ref[...].astype(jnp.float32)
    o_ref[...] = out.astype(o_ref.dtype)


def prepare_classifier_params(gamma, beta, weight, bias):
    """One-time parameter prep (do at init / cache it, NOT per forward call).

    gamma, beta: (C,)   LayerNorm affine params
    weight:      (N, C) Linear weight (PyTorch convention)
    bias:        (N,)   Linear bias
    Returns (gamma2, beta2, w_t_padded, bias_padded) with N padded to a
    multiple of 128 for lane-dense output stores.
    """
    C = gamma.shape[0]
    N = weight.shape[0]
    n_pad = _round_up(N, 128)
    w_t = jnp.pad(weight.T, ((0, 0), (0, n_pad - N)))     # (C, Np)
    b2 = jnp.pad(bias, (0, n_pad - N)).reshape(1, n_pad)  # (1, Np)
    return gamma.reshape(1, C), beta.reshape(1, C), w_t, b2


def _pick_batch_tile(B, C, itemsize):
    """Largest batch tile <= 512 rows that keeps x buffers + y scratch modest."""
    tb = min(512, _round_up(B, 8))
    # 2 double-buffered x tiles + 1 y scratch, leave headroom for W/out buffers
    # (budget chosen for v7x's 64 MiB physical VMEM).
    budget = 24 * 1024 * 1024
    while tb > 8 and 3 * tb * C * itemsize > budget:
        tb //= 2
    return max(tb, 8)


def classifier_forward(x, gamma2, beta2, w_t, bias2, num_classes):
    """Fused LayerNorm + Linear.  x: (B, C) -> (B, num_classes)."""
    B, C = x.shape
    Np = w_t.shape[1]

    tb = _pick_batch_tile(B, C, x.dtype.itemsize)
    Bp = _round_up(B, tb)
    nbt = Bp // tb
    # Keep >= 2 batch tiles when possible so both v7x TensorCores get work.
    if nbt == 1 and Bp >= 16 and (Bp // 2) % 8 == 0:
        tb = Bp // 2
        nbt = 2
    if Bp != B:
        x = jnp.pad(x, ((0, Bp - B), (0, 0)))

    # Output tile width: 256 (v6e/v7x MXU width) when it divides, else 128.
    tn = 256 if Np % 256 == 0 else 128
    grid = (nbt, Np // tn)

    out = pl.pallas_call(
        _classifier_kernel,
        out_shape=jax.ShapeDtypeStruct((Bp, Np), x.dtype),
        grid_spec=pltpu.PrefetchScalarGridSpec(
            num_scalar_prefetch=0,
            grid=grid,
            in_specs=[
                pl.BlockSpec((tb, C), lambda i, j: (i, 0)),   # x rows
                pl.BlockSpec((1, C), lambda i, j: (0, 0)),    # gamma
                pl.BlockSpec((1, C), lambda i, j: (0, 0)),    # beta
                pl.BlockSpec((C, tn), lambda i, j: (0, j)),   # W^T tile
                pl.BlockSpec((1, tn), lambda i, j: (0, j)),   # bias tile
            ],
            out_specs=pl.BlockSpec((tb, tn), lambda i, j: (i, j)),
            scratch_shapes=[pltpu.VMEM((tb, C), x.dtype)],    # normalized y
        ),
        compiler_params=pltpu.CompilerParams(
            dimension_semantics=("parallel", "arbitrary"),
            vmem_limit_bytes=64 * 1024 * 1024,
        ),
    )(x, gamma2, beta2, w_t, bias2)

    return out[:B, :num_classes]


def _reference(x, gamma, beta, weight, bias):
    x32 = x.astype(jnp.float32)
    mean = jnp.mean(x32, axis=-1, keepdims=True)
    var = jnp.mean((x32 - mean) ** 2, axis=-1, keepdims=True)
    xn = (x32 - mean) / jnp.sqrt(var + _LN_EPS)
    y = xn * gamma + beta
    return (y @ weight.T.astype(jnp.float32) + bias).astype(x.dtype)


if __name__ == "__main__":
    key = jax.random.PRNGKey(0)
    B, C, N = 8, 32, 16  # batch, in_channels, num_classes

    k_x, k_w, k_b = jax.random.split(key, 3)
    x = jax.random.normal(k_x, (B, C), dtype=jnp.float32)

    # Deterministic param init (shapes match nn.LayerNorm(C), nn.Linear(C, N)).
    gamma = jnp.ones((C,), dtype=jnp.float32)
    beta = jnp.zeros((C,), dtype=jnp.float32)
    bound = 1.0 / (C ** 0.5)
    weight = jax.random.uniform(k_w, (N, C), minval=-bound, maxval=bound,
                                dtype=jnp.float32)
    bias = jax.random.uniform(k_b, (N,), minval=-bound, maxval=bound,
                              dtype=jnp.float32)

    # One-time parameter prep (transpose + lane padding); cache across calls.
    params = prepare_classifier_params(gamma, beta, weight, bias)
    fwd = functools.partial(classifier_forward, num_classes=N)

    out = fwd(x, *params)
    out = jax.block_until_ready(out)

    ref = _reference(x, gamma, beta, weight, bias)
    assert out.shape == (B, N)
    assert jnp.allclose(out, ref, atol=1e-5, rtol=1e-5), "mismatch vs reference"

    print("KERNEL_OK")
</pallas_src>

<mosaic_0001>
module attributes {stable_mosaic.version = 11 : i64} {
  func.func @_classifier_kernel(%arg0: i32, %arg1: i32, %arg2: memref<8x32xf32, #tpu.memory_space<vmem>>, %arg3: memref<1x32xf32, #tpu.memory_space<vmem>>, %arg4: memref<1x32xf32, #tpu.memory_space<vmem>>, %arg5: memref<32x128xf32, #tpu.memory_space<vmem>>, %arg6: memref<1x128xf32, #tpu.memory_space<vmem>>, %arg7: memref<8x128xf32, #tpu.memory_space<vmem>>, %arg8: memref<8x32xf32, #tpu.memory_space<vmem>>) attributes {dimension_semantics = [#tpu.dimension_semantics<parallel>, #tpu.dimension_semantics<arbitrary>], iteration_bounds = array<i64: 1, 1>, scalar_prefetch = 0 : i64, scratch_operands = 1 : i64, tpu.core_type = #tpu.core_type<tc>, window_params = [{transform_indices = @transform_0, window_bounds = array<i64: 8, 32>}, {pipeline_mode = #tpu.pipeline_mode<synchronous>, transform_indices = @transform_1, window_bounds = array<i64: 1, 32>}, {pipeline_mode = #tpu.pipeline_mode<synchronous>, transform_indices = @transform_2, window_bounds = array<i64: 1, 32>}, {transform_indices = @transform_3, window_bounds = array<i64: 32, 128>}, {transform_indices = @transform_4, window_bounds = array<i64: 1, 128>}, {transform_indices = @transform_5, window_bounds = array<i64: 8, 128>}]} {
    %c0_i32 = arith.constant 0 : i32
    %0 = arith.cmpi eq, %arg1, %c0_i32 : i32
    %1 = arith.extui %0 : i1 to i32
    %c0_i32_0 = arith.constant 0 : i32
    %2 = arith.cmpi ne, %1, %c0_i32_0 : i32
    scf.if %2 {
      %c0_8 = arith.constant 0 : index
      %c0_9 = arith.constant 0 : index
      %10 = vector.load %arg2[%c0_8, %c0_9] : memref<8x32xf32, #tpu.memory_space<vmem>>, vector<8x32xf32>
      %cst_10 = arith.constant dense<0.000000e+00> : vector<8xf32>
      %11 = vector.multi_reduction <add>, %10, %cst_10 [1] : vector<8x32xf32> to vector<8xf32>
      %12 = vector.shape_cast %11 : vector<8xf32> to vector<8x1xf32>
      %cst_11 = arith.constant 3.200000e+01 : f32
      %13 = vector.broadcast %cst_11 : f32 to vector<8x1xf32>
      %14 = arith.divf %12, %13 : vector<8x1xf32>
      %15 = vector.broadcast %14 : vector<8x1xf32> to vector<8x32xf32>
      %16 = arith.subf %10, %15 : vector<8x32xf32>
      %17 = arith.mulf %16, %16 : vector<8x32xf32>
      %cst_12 = arith.constant dense<0.000000e+00> : vector<8xf32>
      %18 = vector.multi_reduction <add>, %17, %cst_12 [1] : vector<8x32xf32> to vector<8xf32>
      %19 = vector.shape_cast %18 : vector<8xf32> to vector<8x1xf32>
      %cst_13 = arith.constant 3.200000e+01 : f32
      %20 = vector.broadcast %cst_13 : f32 to vector<8x1xf32>
      %21 = arith.divf %19, %20 : vector<8x1xf32>
      %cst_14 = arith.constant 9.99999997E-7 : f32
      %22 = vector.broadcast %cst_14 : f32 to vector<8x1xf32>
      %23 = arith.addf %21, %22 : vector<8x1xf32>
      %24 = math.rsqrt %23 : vector<8x1xf32>
      %25 = vector.broadcast %24 : vector<8x1xf32> to vector<8x32xf32>
      %26 = arith.mulf %16, %25 : vector<8x32xf32>
      %c0_15 = arith.constant 0 : index
      %c0_16 = arith.constant 0 : index
      %27 = vector.load %arg3[%c0_15, %c0_16] : memref<1x32xf32, #tpu.memory_space<vmem>>, vector<1x32xf32>
      %28 = vector.broadcast %27 : vector<1x32xf32> to vector<8x32xf32>
      %29 = arith.mulf %26, %28 : vector<8x32xf32>
      %c0_17 = arith.constant 0 : index
      %c0_18 = arith.constant 0 : index
      %30 = vector.load %arg4[%c0_17, %c0_18] : memref<1x32xf32, #tpu.memory_space<vmem>>, vector<1x32xf32>
      %31 = vector.broadcast %30 : vector<1x32xf32> to vector<8x32xf32>
      %32 = arith.addf %29, %31 : vector<8x32xf32>
      %c0_19 = arith.constant 0 : index
      %c0_20 = arith.constant 0 : index
      %33 = vector.load %arg8[%c0_19, %c0_20] : memref<8x32xf32, #tpu.memory_space<vmem>>, vector<8x32xf32>
      tpu.vector_store %arg8[%c0_19, %c0_20], %32 {strides = array<i32>} : memref<8x32xf32, #tpu.memory_space<vmem>>, vector<8x32xf32>,
    } else {
    }
    %c0 = arith.constant 0 : index
    %c0_1 = arith.constant 0 : index
    %3 = vector.load %arg8[%c0, %c0_1] : memref<8x32xf32, #tpu.memory_space<vmem>>, vector<8x32xf32>
    %c0_2 = arith.constant 0 : index
    %c0_3 = arith.constant 0 : index
    %4 = vector.load %arg5[%c0_2, %c0_3] : memref<32x128xf32, #tpu.memory_space<vmem>>, vector<32x128xf32>
    %cst = arith.constant dense<0.000000e+00> : vector<8x128xf32>
    %5 = tpu.matmul %3, %4, %cst {dimension_numbers = #tpu.dot_dimension_numbers<[1], [0], [0], [1], [0, 0, 1, 1], [], []>} : vector<8x32xf32>, vector<32x128xf32>, vector<8x128xf32> -> vector<8x128xf32>
    %c0_4 = arith.constant 0 : index
    %c0_5 = arith.constant 0 : index
    %6 = vector.load %arg6[%c0_4, %c0_5] : memref<1x128xf32, #tpu.memory_space<vmem>>, vector<1x128xf32>
    %7 = vector.broadcast %6 : vector<1x128xf32> to vector<8x128xf32>
    %8 = arith.addf %5, %7 : vector<8x128xf32>
    %c0_6 = arith.constant 0 : index
    %c0_7 = arith.constant 0 : index
    %9 = vector.load %arg7[%c0_6, %c0_7] : memref<8x128xf32, #tpu.memory_space<vmem>>, vector<8x128xf32>
    tpu.vector_store %arg7[%c0_6, %c0_7], %8 {strides = array<i32>} : memref<8x128xf32, #tpu.memory_space<vmem>>, vector<8x128xf32>,
    return
  }
  func.func @transform_0(%arg0: i32, %arg1: i32) -> (i32, i32) {
    %c0_i32 = arith.constant 0 : i32
    %c0_i32_0 = arith.constant 0 : i32
    return %arg0, %c0_i32 : i32, i32
  }
  func.func @transform_1(%arg0: i32, %arg1: i32) -> (i32, i32) {
    %c0_i32 = arith.constant 0 : i32
    %c0_i32_0 = arith.constant 0 : i32
    %c0_i32_1 = arith.constant 0 : i32
    return %c0_i32, %c0_i32_0 : i32, i32
  }
  func.func @transform_2(%arg0: i32, %arg1: i32) -> (i32, i32) {
    %c0_i32 = arith.constant 0 : i32
    %c0_i32_0 = arith.constant 0 : i32
    %c0_i32_1 = arith.constant 0 : i32
    return %c0_i32, %c0_i32_0 : i32, i32
  }
  func.func @transform_3(%arg0: i32, %arg1: i32) -> (i32, i32) {
    %c0_i32 = arith.constant 0 : i32
    %c0_i32_0 = arith.constant 0 : i32
    return %c0_i32, %arg1 : i32, i32
  }
  func.func @transform_4(%arg0: i32, %arg1: i32) -> (i32, i32) {
    %c0_i32 = arith.constant 0 : i32
    %c0_i32_0 = arith.constant 0 : i32
    return %c0_i32, %arg1 : i32, i32
  }
  func.func @transform_5(%arg0: i32, %arg1: i32) -> (i32, i32) {
    %c0_i32 = arith.constant 0 : i32
    return %arg0, %arg1 : i32, i32
  }
}

</mosaic_0001>

<llo_original>
// kernel: tpu_custom_call.1
$region0: #{tpu_custom_call.1}
  #allocation0 [shape = 'u32[]', space=smem, size = 0x4, offset = 0x4, fixed_abs, tag = 'smem constant byte address 0x4 - core index']
  #allocation1 [shape = 'u32[144,128]{1,0:T(1,128)}', space=vmem, size = 0x12000, scoped, tag = 'internal scratch']
  #allocation2 [shape = 'f32[8,32]{1,0:T(8,128)}', space=vmem, size = 0x1000, scoped, tag = 'scratch operand']
  %s0 = inlined_call_operand.hbm [shape: f32[8,32], index: 0, kind: input, shape index: {}]
  %s1 = inlined_call_operand.vmem [shape: f32[1,32], index: 1, kind: input, shape index: {}]
  %s2 = inlined_call_operand.vmem [shape: f32[1,32], index: 2, kind: input, shape index: {}]
  %s3 = inlined_call_operand.hbm [shape: f32[32,128], index: 3, kind: input, shape index: {}]
  %s4 = inlined_call_operand.vmem [shape: f32[1,128], index: 4, kind: input, shape index: {}]
  %s5 = inlined_call_operand.hbm [shape: f32[8,128], index: 5, kind: output, shape index: {}]
  %s6 = sld [smem:[#allocation0]]
  $region42: #{tpu_custom_call.1} parent=0
    _
  %s8 = ssub.s32 1, %s6
  %s9 = scalar_select 0, %s8, %s6
  $region1: #{tpu_custom_call.1} parent=0
    #allocation3 [shape = 'u8[4096]{0}', space=vmem, size = 0x1000, scoped, tag = 'input window, operand 0, single buffered']
    #allocation4 [shape = 's32[1]{0}', space=sflag, size = 0x4, scoped, tag = 'scoped memory for tpu_custom_call.1']
    #allocation5 [shape = 's32[1]{0}', space=sflag, size = 0x4, scoped, tag = 'scoped memory for tpu_custom_call.1']
    #allocation6 [shape = 'u8[16384]{0}', space=vmem, size = 0x4000, scoped, tag = 'input window, operand 3, single buffered']
    #allocation7 [shape = 's32[1]{0}', space=sflag, size = 0x4, scoped, tag = 'scoped memory for tpu_custom_call.1']
    #allocation8 [shape = 'u8[4096]{0}', space=vmem, size = 0x1000, scoped, tag = 'output window, operand 0, single buffered']
    %10 = vsyncpa [#allocation4], 0
    %11 = vsyncpa [#allocation7], 0
    %12 = vsyncpa [#allocation5], 0
    // Predicated region
    $region2: #{tpu_custom_call.1} parent=1 // pred_check
      _
    $region3: #{tpu_custom_call.1} parent=1 // pred_check_branch
      %14 = sbr.rel (0) target = $region5
    $region4: #{tpu_custom_call.1} parent=1 // pred_region
      %s16 = ssub.s32 128, 128
      %17 = vsyncadd [#allocation4], %s16
      %s19 = sshll.u32 [#allocation3], 4
      %s20 = int_to_ptr.vmem [resolvable:$true] %s19
      %22 = dma.hbm_to_vmem [thread:$0]  %s0, 128, %s20, [#allocation4]
    $region5: #{tpu_custom_call.1} parent=1 // pred_fallthru
      _
    // Predicated region
    $region6: #{tpu_custom_call.1} parent=1 // pred_check
      _
    $region7: #{tpu_custom_call.1} parent=1 // pred_check_branch
      %24 = sbr.rel (0) target = $region9
    $region8: #{tpu_custom_call.1} parent=1 // pred_region
      _
    $region9: #{tpu_custom_call.1} parent=1 // pred_fallthru
      _
    // Predicated region
    $region10: #{tpu_custom_call.1} parent=1 // pred_check
      _
    $region11: #{tpu_custom_call.1} parent=1 // pred_check_branch
      %26 = sbr.rel (0) target = $region13
    $region12: #{tpu_custom_call.1} parent=1 // pred_region
      _
    $region13: #{tpu_custom_call.1} parent=1 // pred_fallthru
      _
    // Predicated region
    $region14: #{tpu_custom_call.1} parent=1 // pred_check
      _
    $region15: #{tpu_custom_call.1} parent=1 // pred_check_branch
      %28 = sbr.rel (0) target = $region17
    $region16: #{tpu_custom_call.1} parent=1 // pred_region
      %s30 = ssub.s32 512, 512
      %31 = vsyncadd [#allocation7], %s30
      %s32 = sshll.u32 [#allocation6], 4
      %s33 = int_to_ptr.vmem [resolvable:$true] %s32
      %38 = dma.hbm_to_vmem [thread:$0]  %s3, 512, %s33, [#allocation7], 128, 128, 8
    $region17: #{tpu_custom_call.1} parent=1 // pred_fallthru
      _
    // Predicated region
    $region18: #{tpu_custom_call.1} parent=1 // pred_check
      _
    $region19: #{tpu_custom_call.1} parent=1 // pred_check_branch
      %40 = sbr.rel (0) target = $region21
    $region20: #{tpu_custom_call.1} parent=1 // pred_region
      _
    $region21: #{tpu_custom_call.1} parent=1 // pred_fallthru
      _
    // Predicated region
    $region22: #{tpu_custom_call.1} parent=1 // pred_check
      _
    $region23: #{tpu_custom_call.1} parent=1 // pred_check_branch
      %42 = sbr.rel (0) target = $region25
    $region24: #{tpu_custom_call.1} parent=1 // pred_region
      %43 = dma.done [#allocation4], 128
    $region25: #{tpu_custom_call.1} parent=1 // pred_fallthru
      _
    // Predicated region
    $region26: #{tpu_custom_call.1} parent=1 // pred_check
      _
    $region27: #{tpu_custom_call.1} parent=1 // pred_check_branch
      %45 = sbr.rel (0) target = $region29
    $region28: #{tpu_custom_call.1} parent=1 // pred_region
      %46 = dma.done [#allocation7], 512
    $region29: #{tpu_custom_call.1} parent=1 // pred_fallthru
      _
    %p47 = scmp.eq.s32.totalorder 0, 0
    // Predicated region
    $region30: #{tpu_custom_call.1} parent=1 // pred_check
      %p48 = pneg %p47
    $region31: #{tpu_custom_call.1} parent=1 // pred_check_branch
      %50 = sbr.rel (%p48) target = $region33
    $region32: #{tpu_custom_call.1} parent=1 // pred_region
      %v51 = vld [vmem:[#allocation3] sm:$0xff]
      %vm52 = vcmask 261120
      %v53 = vsel %vm52, %v51, 0.0
      %54 = vadd.xlane.f32.xlu0 %v53
      %v55 = vpop.xlane.xlu0 %54
      %v56 = vrcp.pop 32.0
      %v57 = vmul.f32 %v55, %v56
      %v58 = vsub.f32 %v51, %v57
      %v59 = vmul.f32 %v58, %v58
      %v60 = vsel %vm52, %v59, 0.0
      %61 = vadd.xlane.f32.xlu0 %v60
      %v62 = vpop.xlane.xlu0 %61
      %v63 = vmul.f32 %v62, %v56
      %v64 = vadd.f32 %v63, 1e-06
      %v65 = vrsqrt.pop %v64
      %v66 = vmul.f32 %v58, %v65
      %v67 = vld [vmem:[%s1] sm:$0x1]
      %v69 = vlaneseq
      %v70 = vshrl.u32 %v69, 7
      %v71 = vsub.s32 0, %v70
      %v72 = vrot.slane %v67, %v71
      %v74 = vmul.f32 %v66, %v72
      %v75 = vld [vmem:[%s2] sm:$0x1]
      %v77 = vlaneseq
      %v78 = vshrl.u32 %v77, 7
      %v79 = vsub.s32 0, %v78
      %v80 = vrot.slane %v75, %v79
      %v82 = vadd.f32 %v74, %v80
      %83 = vst.msk [vmem:[#allocation2] sm:$0xff] %vm52, %v82
    $region33: #{tpu_custom_call.1} parent=1 // pred_fallthru
      _
    %v84 = vld [vmem:[#allocation2] sm:$0xff]
    %v85 = vld [vmem:[#allocation6] sm:$0xff]
    %v86 = vld [vmem:[#allocation6 + $0x8] sm:$0xff]
    %v87 = vld [vmem:[#allocation6 + $0x10] sm:$0xff]
    %v88 = vld [vmem:[#allocation6 + $0x18] sm:$0xff]
    %v89 = vld [vmem:[%s4] sm:$0x1]
    %v91 = vlaneseq
    %v92 = vshrl.u32 %v91, 7
    %v93 = vsub.s32 0, %v92
    %v94 = vrot.slane %v89, %v93
    %vm96 = vcmask 261120
    %v98 = vsel %vm96, %v84, 0
    %100 = vmatprep.subr.mxu0 0.0
    %101 = vmatpush1.msra.mxu0 0.0
    %102 = vmatprep.subr.mxu0 0.0
    %103 = vmatpush1.msra.mxu0 0.0
    %104 = vmatprep.subr.mxu0 0.0
    %105 = vmatpush1.msra.mxu0 0.0
    %106 = vmatprep.subr.mxu0 0.0
    %107 = vmatpush1.msra.mxu0 0.0
    %108 = vmatprep.subr.mxu0 0.0
    %109 = vmatpush1.msra.mxu0 0.0
    %110 = vmatprep.subr.mxu0 0.0
    %111 = vmatpush1.msra.mxu0 0.0
    %112 = vmatprep.subr.mxu0 0.0
    %113 = vmatpush1.msra.mxu0 0.0
    %114 = vmatprep.subr.mxu0 0.0
    %115 = vmatpush1.msra.mxu0 0.0
    %116 = vmatprep.subr.mxu0 0.0
    %117 = vmatpush1.msra.mxu0 0.0
    %118 = vmatprep.subr.mxu0 0.0
    %119 = vmatpush1.msra.mxu0 0.0
    %120 = vmatprep.subr.mxu0 0.0
    %121 = vmatpush1.msra.mxu0 0.0
    %122 = vmatprep.subr.mxu0 0.0
    %123 = vmatpush1.msra.mxu0 0.0
    %124 = vmatprep.subr.mxu0 0.0
    %125 = vmatpush1.msra.mxu0 %v88
    %126 = vmatprep.subr.mxu0 0.0
    %127 = vmatpush1.msra.mxu0 %v87
    %128 = vmatprep.subr.mxu0 0.0
    %129 = vmatpush1.msra.mxu0 %v86
    %130 = vmatprep.subr.mxu0 0.0
    %131 = vmatpush1.msra.mxu0 %v85
    %132 = vmatprep.subr.mxu0 0.0
    %133 = vmatpush2.msra.mxu0 0.0
    %134 = vmatprep.subr.mxu0 0.0
    %135 = vmatpush2.msra.mxu0 0.0
    %136 = vmatprep.subr.mxu0 0.0
    %137 = vmatpush2.msra.mxu0 0.0
    %138 = vmatprep.subr.mxu0 0.0
    %139 = vmatpush2.msra.mxu0 0.0
    %140 = vmatprep.subr.mxu0 0.0
    %141 = vmatpush2.msra.mxu0 0.0
    %142 = vmatprep.subr.mxu0 0.0
    %143 = vmatpush2.msra.mxu0 0.0
    %144 = vmatprep.subr.mxu0 0.0
    %145 = vmatpush2.msra.mxu0 0.0
    %146 = vmatprep.subr.mxu0 0.0
    %147 = vmatpush2.msra.mxu0 0.0
    %148 = vmatprep.subr.mxu0 0.0
    %149 = vmatpush2.msra.mxu0 0.0
    %150 = vmatprep.subr.mxu0 0.0
    %151 = vmatpush2.msra.mxu0 0.0
    %152 = vmatprep.subr.mxu0 0.0
    %153 = vmatpush2.msra.mxu0 0.0
    %154 = vmatprep.subr.mxu0 0.0
    %155 = vmatpush2.msra.mxu0 0.0
    %156 = vmatprep.subr.mxu0 0.0
    %157 = vmatpush2.msra.mxu0 0.0
    %158 = vmatprep.subr.mxu0 0.0
    %159 = vmatpush2.msra.mxu0 0.0
    %160 = vmatprep.subr.mxu0 0.0
    %161 = vmatpush2.msra.mxu0 0.0
    %162 = vmatprep.subr.mxu0 0.0
    %163 = vmatpush2.msra.mxu0 0.0
    %164 = vmatprep.mubr.f32.mxu0 0.0
    %165 = vmatmul.mubr.f32.gmra.mxu0 %v98
    %v166 = vpop.f32.mrf.mxu0
    %v167 = vadd.f32 %v94, %v166
    %v168 = vpop.f32.mrf.mxu0
    %169 = vdwg.mxu0
    %170 = vst [vmem:[#allocation8] sm:$0xff] %v167
    // Predicated region
    $region34: #{tpu_custom_call.1} parent=1 // pred_check
      _
    $region35: #{tpu_custom_call.1} parent=1 // pred_check_branch
      %172 = sbr.rel (0) target = $region37
    $region36: #{tpu_custom_call.1} parent=1 // pred_region
      %s174 = ssub.s32 128, 128
      %175 = vsyncadd [#allocation5], %s174
      %s177 = sshll.u32 [#allocation8], 4
      %s178 = int_to_ptr.vmem [resolvable:$true] %s177
      %180 = dma.vmem_to_hbm [thread:$0]  %s178, 128, %s5, [#allocation5]
    $region37: #{tpu_custom_call.1} parent=1 // pred_fallthru
      _
    // Predicated region
    $region38: #{tpu_custom_call.1} parent=1 // pred_check
      _
    $region39: #{tpu_custom_call.1} parent=1 // pred_check_branch
      %182 = sbr.rel (0) target = $region41
    $region40: #{tpu_custom_call.1} parent=1 // pred_region
      %183 = dma.done [#allocation5], 128
    $region41: #{tpu_custom_call.1} parent=1 // pred_fallthru
      _
    %184 = vsyncpa [#allocation4], 1
    %185 = vsyncpa [#allocation7], 1
    %186 = vsyncpa [#allocation5], 1

</llo_original>
